<compile_context>
chip_gen: v5e
topology: v5e:2x2
jax: 0.10.0
libtpu: 0.0.40
codegen_flags: <defaults>
</compile_context>

<pallas_src>
import functools
import math

import jax
import jax.numpy as jnp
from jax import lax
from jax.experimental import pallas as pl
from jax.experimental.pallas import tpu as pltpu


def _round_up(x, m):
    return (x + m - 1) // m * m


def _device_kind():
    try:
        return jax.devices()[0].device_kind.lower()
    except Exception:
        return ""


def _num_tensorcores():
    """TensorCores sharing one grid via megacore ('parallel' dims)."""
    kind = _device_kind()
    if any(t in kind for t in ("lite", "v5e", "v6e", "v6")):
        return 1                       # v5e / v6e: single TC per chip
    if any(t in kind for t in ("v2", "v3", "v4", "v5", "v7")):
        return 2                       # megacore / dual-TC chips (incl. v7x)
    return 1


def _mxu_lanes():
    kind = _device_kind()
    if any(t in kind for t in ("v2", "v3", "v4", "v5")):
        return 128                     # 128-wide MXU: tn>128 just splits pushes
    return 256                         # v6e / v7x 256x256 MXU


def _vmem_capacity_bytes():
    try:
        return int(pltpu.get_tpu_info().vmem_capacity_bytes)
    except Exception:
        return 64 << 20                # conservative default (v7x per-TC VMEM)


# ----------------------------------------------------------------------------
# Optional single-buffering of the grid-constant image block (probed once,
# OUTSIDE jit, so an unsupported pipeline_mode=pl.Buffered(1) degrades cleanly).
# ----------------------------------------------------------------------------
_SINGLE_BUFFER_MODE = None   # None = unprobed, False = unsupported, else pl.Buffered(1)


def probe_single_buffering():
    global _SINGLE_BUFFER_MODE
    if _SINGLE_BUFFER_MODE is not None:
        return
    def _copy(x_ref, o_ref):
        o_ref[...] = x_ref[...]
    try:
        spec = pl.BlockSpec((8, 128), lambda i: (0, 0), pipeline_mode=pl.Buffered(1))
        fn = pl.pallas_call(
            _copy,
            out_shape=jax.ShapeDtypeStruct((8, 128), jnp.float32),
            grid=(2,),
            in_specs=[spec],
            out_specs=pl.BlockSpec((8, 128), lambda i: (0, 0)),
        )
        x0 = jnp.arange(8 * 128, dtype=jnp.float32).reshape(8, 128)
        y = jax.block_until_ready(fn(x0))
        _SINGLE_BUFFER_MODE = pl.Buffered(1) if bool(jnp.array_equal(y, x0)) else False
    except Exception:
        _SINGLE_BUFFER_MODE = False


def _choose_row_tiling(h, wo, tn, num_cores, acc_budget_elems=48 * 1024):
    """Rows per output tile: large M (amortize grid-step overhead / fill the MXU),
    f32 accumulator <= ~48 vregs, and an even number of >= num_cores row tiles on
    dual-TC chips.  H is padded to tile_h * n_tiles (never tile_h = 1 fallback)."""
    th = max(1, min(h, acc_budget_elems // max(wo * tn, 1)))
    if num_cores > 1:
        th = min(th, -(-h // num_cores))
        while th > 1 and (-(-h // th)) % num_cores != 0:
            th -= 1
    n_tiles = -(-h // th)
    return th, n_tiles


# ----------------------------------------------------------------------------
# Fused stride-1 / zero-pad-(K//2) conv kernel, NHWC layout, kx-folded weights.
# ----------------------------------------------------------------------------
def _conv_same_kernel(x_ref, w_ref, b_ref, o_ref, *, tile_h, wo, k):
    # x_ref : (1, hp, wo, K*Cin)  zero-padded image, kx taps folded into channels
    # w_ref : (K, K*Cin, tn)      per-ky weight slabs
    # b_ref : (1, tn)
    # o_ref : (1, tile_h, wo, tn) lane-dense output tile
    r = pl.program_id(2)
    row0 = pl.multiple_of(r * tile_h, tile_h)
    cfold = x_ref.shape[-1]
    tn = o_ref.shape[-1]

    acc = jnp.zeros((tile_h * wo, tn), jnp.float32)
    for ky in range(k):                                  # K aligned row-shifted matmuls
        patch = x_ref[0, pl.ds(row0 + ky, tile_h), :, :]
        acc = acc + jnp.dot(patch.reshape(tile_h * wo, cfold), w_ref[ky],
                            preferred_element_type=jnp.float32)
    out = acc + b_ref[...]                               # fused bias
    o_ref[...] = out.reshape(1, tile_h, wo, tn).astype(o_ref.dtype)


def conv2d_same_nhwc_pallas(x_nhwc, w, b, *, out_dtype=jnp.bfloat16, crop=True):
    """nn.Conv2d(Cin, Cout, K, stride=1, padding=K//2) on an NHWC activation.

    x_nhwc: (B, H, W, Cin); w: (Cout, Cin, K, K) (OIHW); b: (Cout,).
    Returns (B, H, W, Cout) in `out_dtype` (crop=True), or the lane-dense padded
    (B, Hp, Wp, Coutp) slab (crop=False) for chaining NHWC modules.
    MXU operands are bf16, accumulation is f32.
    """
    B, H, W, cin = x_nhwc.shape
    cout, cin2, K, K2 = w.shape
    assert cin == cin2 and K == K2 and K % 2 == 1
    pad = K // 2

    coutp = _round_up(cout, 128)           # lane-dense output channels
    wo = _round_up(W, 8)                   # sublane-aligned output width
    cfold = K * cin                        # kx taps folded into contraction dim

    mxu_n = _mxu_lanes()
    tn = mxu_n if coutp % mxu_n == 0 else 128
    num_cores = _num_tensorcores()
    tile_h, n_row = _choose_row_tiling(H, wo, tn, num_cores)
    ho = tile_h * n_row                    # row-padded output height
    hp = ho + K - 1                        # resident input rows incl. halo

    # Zero-pad spatially, fold the K width shifts of the padded image into the
    # channel (lane/contraction) dim, cast operands to bf16:
    #   xs[b, y, x, kx*Cin + c] = x_padded[b, y, x + kx, c]
    xb = x_nhwc.astype(jnp.bfloat16)
    xp = jnp.pad(xb, ((0, 0), (pad, pad + ho - H), (pad, wo - W + pad), (0, 0)))
    xs = jnp.concatenate([xp[:, :, kx:kx + wo, :] for kx in range(K)], axis=-1)

    # (Cout, Cin, Ky, Kx) -> (Ky, Kx*Cin, Coutp):  wt[ky, kx*Cin + c, o] = w[o, c, ky, kx]
    wt = jnp.transpose(w, (2, 3, 1, 0)).reshape(K, cfold, cout)
    wt = jnp.pad(wt, ((0, 0), (0, 0), (0, coutp - cout))).astype(jnp.bfloat16)
    bias = jnp.pad(b.astype(jnp.float32), (0, coutp - cout)).reshape(1, coutp)

    grid = (B, coutp // tn, n_row)         # rows innermost: weight/bias stay resident

    # --- VMEM accounting (conservative, tile-padded) ------------------------
    def _blk_bytes(shape, dtype):
        s = list(shape)
        itemsize = jnp.dtype(dtype).itemsize
        s[-1] = _round_up(s[-1], 128)
        if len(s) >= 2:
            s[-2] = _round_up(s[-2], 8 * (4 // itemsize))
        n = 1
        for d in s:
            n *= d
        return n * itemsize

    img_bufs = 1 if _SINGLE_BUFFER_MODE else 2
    out_itemsize = jnp.dtype(out_dtype).itemsize
    need = (img_bufs * _blk_bytes((1, hp, wo, cfold), jnp.bfloat16)
            + 2 * _blk_bytes((K, cfold, tn), jnp.bfloat16)
            + 2 * _blk_bytes((1, tn), jnp.float32)
            + 2 * _blk_bytes((1, tile_h, wo, tn), out_dtype))
    cap = _vmem_capacity_bytes()
    if need > (cap * 3) // 4:
        # TODO(synk): row-tiled halo DMA (manual pltpu.make_async_copy double
        # buffering, VMEM O(tile_h)) for activations whose padded NHWC slab does
        # not fit VMEM (high-resolution layers, especially v7x's 64 MiB).
        raise NotImplementedError(
            f"resident padded image needs ~{need >> 20} MiB VMEM (> 3/4 of {cap >> 20} MiB)")
    vmem_limit = int(min(cap, max(2 * need + (8 << 20), 32 << 20)))

    img_kwargs = dict(pipeline_mode=_SINGLE_BUFFER_MODE) if _SINGLE_BUFFER_MODE else {}
    in_specs = [
        # Whole padded/folded image: block index constant over (j, r), so it is
        # DMA'd once per batch element and (when supported) single-buffered.
        pl.BlockSpec((1, hp, wo, cfold), lambda bb, j, r: (bb, 0, 0, 0), **img_kwargs),
        pl.BlockSpec((K, cfold, tn), lambda bb, j, r: (0, 0, j)),
        pl.BlockSpec((1, tn), lambda bb, j, r: (0, j)),
    ]
    out_spec = pl.BlockSpec((1, tile_h, wo, tn), lambda bb, j, r: (bb, r, 0, j))

    cost = pl.CostEstimate(
        flops=2 * B * H * W * K * K * cin * cout,
        transcendentals=0,
        bytes_accessed=int(xs.size * 2 + wt.size * 2 + bias.size * 4
                           + B * ho * wo * coutp * out_itemsize),
    )

    out = pl.pallas_call(
        functools.partial(_conv_same_kernel, tile_h=tile_h, wo=wo, k=K),
        out_shape=jax.ShapeDtypeStruct((B, ho, wo, coutp), out_dtype),
        grid=grid,
        in_specs=in_specs,
        out_specs=out_spec,
        compiler_params=pltpu.CompilerParams(
            dimension_semantics=("parallel", "parallel", "parallel"),
            vmem_limit_bytes=vmem_limit),
        cost_estimate=cost,
    )(xs, wt, bias)

    if crop:
        out = out[:, :H, :W, :cout]
    return out


# ----------------------------------------------------------------------------
# ModulatedConv2d2 forward (default flags, NCHW module API)
# ----------------------------------------------------------------------------
def modulated_conv2d2_forward(params, x, style, *, use_style=True, demodulate=True,
                              upsample=False, downsample=False, cgroup=1,
                              out_dtype=jnp.bfloat16):
    if upsample or downsample or cgroup != 1:
        # TODO(synk): grouped conv_transpose2d + blur (upsample), Blur/upfirdn2d +
        # stride-2 conv (downsample) and cgroup>1 grouped convs are not implemented.
        raise NotImplementedError("only the default stride-1 path is implemented")

    B, cin, H, W = x.shape
    cout, _, K, _ = params["convs_w"].shape
    scale = 1.0 / math.sqrt(cin * K * K)

    # --- style -> modulated/demodulated weight.  Faithful to the torch stride-1
    #     path, where this weight is built but never applied (dead code; DCE'd). ---
    if use_style:
        s = jnp.where(style >= 0, style, 0.2 * style)        # LeakyReLU(0.2)
        s = s @ params["mod_w"].T + params["mod_b"]          # Linear (M=B=1: plain dot)
        s = s.reshape(B, 1, cin, 1, 1)
        wmod = scale * params["weight"] * s
        wmod = jnp.clip(wmod, 0.0, 6.0)                      # self.wl = nn.ReLU6(...)
    else:
        wmod = scale * params["weight"] * jnp.ones((B, 1, cin, 1, 1), x.dtype)
    if demodulate:
        demod = lax.rsqrt(jnp.sum(wmod * wmod, axis=(2, 3, 4)) + 1e-8)
        wmod = wmod * demod.reshape(B, cout, 1, 1, 1)
    _ = wmod.reshape(B * cout, cin, K, K)                    # unused here, as in torch

    # --- actual output path: self.convs(input.view(1, B*Cin, H, W)) ---
    assert B == 1, "stride-1 ModulatedConv2d2 path requires batch == 1 (as in torch)"
    x_nhwc = jnp.transpose(x.reshape(1, B * cin, H, W), (0, 2, 3, 1))
    out = conv2d_same_nhwc_pallas(x_nhwc, params["convs_w"], params["convs_b"],
                                  out_dtype=out_dtype, crop=True)
    # Module boundary: back to NCHW.  (Chained NHWC modules should instead use
    # conv2d_same_nhwc_pallas(..., crop=False) and stay in the padded NHWC slab.)
    return jnp.transpose(out, (0, 3, 1, 2)).reshape(B, cout, H, W)


# ----------------------------------------------------------------------------
# Deterministic parameter init (shapes from ModulatedConv2d2.__init__)
# ----------------------------------------------------------------------------
def init_params(key, *, in_channel, out_channel, kernel_size, style_dim):
    ks = jax.random.split(key, 5)
    fan_in = in_channel * kernel_size ** 2
    return {
        # self.weight: (1, out_channel, in_channel, k, k), randn
        "weight": jax.random.normal(
            ks[0], (1, out_channel, in_channel, kernel_size, kernel_size), jnp.float32),
        # self.modulation = Sequential(LeakyReLU(0.2), Linear(style_dim, in_channel))
        "mod_w": jax.random.normal(ks[1], (in_channel, style_dim), jnp.float32)
                 / math.sqrt(style_dim),
        "mod_b": 0.01 * jax.random.normal(ks[2], (in_channel,), jnp.float32),
        # self.convs = Conv2d(in_channel, out_channel, k, stride=1, padding=k//2)
        "convs_w": jax.random.normal(
            ks[3], (out_channel, in_channel, kernel_size, kernel_size), jnp.float32)
                   / math.sqrt(fan_in),
        "convs_b": 0.01 * jax.random.normal(ks[4], (out_channel,), jnp.float32),
    }


if __name__ == "__main__":
    probe_single_buffering()   # decide pipeline_mode=pl.Buffered(1) outside jit

    key = jax.random.PRNGKey(0)
    k_par, k_x, k_s = jax.random.split(key, 3)

    # batch must be 1 for the stride-1 path (input.view(1, B*Cin, H, W) -> Conv2d(Cin,...))
    B, CIN, COUT, KSZ, SDIM, HW = 1, 16, 32, 3, 32, 16
    params = init_params(k_par, in_channel=CIN, out_channel=COUT,
                         kernel_size=KSZ, style_dim=SDIM)
    x = jax.random.normal(k_x, (B, CIN, HW, HW), jnp.float32)
    style = jax.random.normal(k_s, (B, SDIM), jnp.float32)

    fwd = jax.jit(modulated_conv2d2_forward)
    out = jax.block_until_ready(fwd(params, x, style))
    assert out.shape == (B, COUT, HW, HW), out.shape

    # Reference conv with bf16-rounded operands (matching the kernel's MXU inputs),
    # f32 accumulation via HIGHEST precision.  The kernel additionally rounds its
    # output to bf16, hence the slightly looser tolerance.
    xr = x.astype(jnp.bfloat16).astype(jnp.float32)
    wr = params["convs_w"].astype(jnp.bfloat16).astype(jnp.float32)
    ref = lax.conv_general_dilated(
        xr, wr, window_strides=(1, 1),
        padding=((KSZ // 2, KSZ // 2), (KSZ // 2, KSZ // 2)),
        dimension_numbers=("NCHW", "OIHW", "NCHW"),
        precision=lax.Precision.HIGHEST)
    ref = ref + params["convs_b"].reshape(1, -1, 1, 1)
    err = float(jnp.max(jnp.abs(out.astype(jnp.float32) - ref)))
    assert err < 3e-2, f"max abs err {err}"
    print("KERNEL_OK")
</pallas_src>

<mosaic_0001>
module attributes {stable_mosaic.version = 11 : i64} {
  func.func @_copy(%arg0: i32, %arg1: memref<8x128xf32, #tpu.memory_space<vmem>>, %arg2: memref<8x128xf32, #tpu.memory_space<vmem>>) attributes {dimension_semantics = [#tpu.dimension_semantics<arbitrary>], iteration_bounds = array<i64: 2>, scalar_prefetch = 0 : i64, scratch_operands = 0 : i64, tpu.core_type = #tpu.core_type<tc>, window_params = [{pipeline_mode = #tpu.pipeline_mode<synchronous>, transform_indices = @transform_0, window_bounds = array<i64: 8, 128>}, {pipeline_mode = #tpu.pipeline_mode<synchronous>, transform_indices = @transform_1, window_bounds = array<i64: 8, 128>}]} {
    %c0 = arith.constant 0 : index
    %c0_0 = arith.constant 0 : index
    %0 = vector.load %arg1[%c0, %c0_0] : memref<8x128xf32, #tpu.memory_space<vmem>>, vector<8x128xf32>
    %c0_1 = arith.constant 0 : index
    %c0_2 = arith.constant 0 : index
    %1 = vector.load %arg2[%c0_1, %c0_2] : memref<8x128xf32, #tpu.memory_space<vmem>>, vector<8x128xf32>
    tpu.vector_store %arg2[%c0_1, %c0_2], %0 {strides = array<i32>} : memref<8x128xf32, #tpu.memory_space<vmem>>, vector<8x128xf32>,
    return
  }
  func.func @transform_0(%arg0: i32) -> (i32, i32) {
    %c0_i32 = arith.constant 0 : i32
    %c0_i32_0 = arith.constant 0 : i32
    %c0_i32_1 = arith.constant 0 : i32
    return %c0_i32, %c0_i32_0 : i32, i32
  }
  func.func @transform_1(%arg0: i32) -> (i32, i32) {
    %c0_i32 = arith.constant 0 : i32
    %c0_i32_0 = arith.constant 0 : i32
    %c0_i32_1 = arith.constant 0 : i32
    return %c0_i32, %c0_i32_0 : i32, i32
  }
}

module attributes {stable_mosaic.version = 11 : i64} {
  func.func @_conv_same_kernel(%arg0: i32, %arg1: i32, %arg2: i32, %arg3: memref<1x18x16x48xbf16, #tpu.memory_space<vmem>>, %arg4: memref<3x48x128xbf16, #tpu.memory_space<vmem>>, %arg5: memref<1x128xf32, #tpu.memory_space<vmem>>, %arg6: memref<1x16x16x128xbf16, #tpu.memory_space<vmem>>) attributes {dimension_semantics = [#tpu.dimension_semantics<parallel>, #tpu.dimension_semantics<parallel>, #tpu.dimension_semantics<parallel>], iteration_bounds = array<i64: 1, 1, 1>, scalar_prefetch = 0 : i64, scratch_operands = 0 : i64, tpu.core_type = #tpu.core_type<tc>, window_params = [{transform_indices = @transform_0, window_bounds = array<i64: 1, 18, 16, 48>}, {transform_indices = @transform_1, window_bounds = array<i64: 3, 48, 128>}, {transform_indices = @transform_2, window_bounds = array<i64: 1, 128>}, {transform_indices = @transform_3, window_bounds = array<i64: 1, 16, 16, 128>}]} {
    %c16_i32 = arith.constant 16 : i32
    %0 = arith.muli %arg2, %c16_i32 : i32
    %1 = tpu.assume_multiple %0, 16 : i32
    %cst = arith.constant 0.000000e+00 : f32
    %2 = vector.broadcast %cst : f32 to vector<256x128xf32>
    %c0_i32 = arith.constant 0 : i32
    %3 = arith.addi %1, %c0_i32 : i32
    %c0 = arith.constant 0 : index
    %4 = arith.index_cast %3 : i32 to index
    %c0_0 = arith.constant 0 : index
    %c0_1 = arith.constant 0 : index
    %5 = vector.load %arg3[%c0, %4, %c0_0, %c0_1] : memref<1x18x16x48xbf16, #tpu.memory_space<vmem>>, vector<1x16x16x48xbf16>
    %6 = vector.shape_cast %5 : vector<1x16x16x48xbf16> to vector<16x16x48xbf16>
    %7 = vector.shape_cast %6 : vector<16x16x48xbf16> to vector<256x48xbf16>
    %c0_2 = arith.constant 0 : index
    %c0_3 = arith.constant 0 : index
    %c0_4 = arith.constant 0 : index
    %8 = vector.load %arg4[%c0_2, %c0_3, %c0_4] : memref<3x48x128xbf16, #tpu.memory_space<vmem>>, vector<1x48x128xbf16>
    %9 = vector.shape_cast %8 : vector<1x48x128xbf16> to vector<48x128xbf16>
    %cst_5 = arith.constant dense<0.000000e+00> : vector<256x128xf32>
    %10 = tpu.matmul %7, %9, %cst_5 {dimension_numbers = #tpu.dot_dimension_numbers<[1], [0], [0], [1], [0, 0, 1, 1], [], []>} : vector<256x48xbf16>, vector<48x128xbf16>, vector<256x128xf32> -> vector<256x128xf32>
    %11 = arith.addf %2, %10 : vector<256x128xf32>
    %c1_i32 = arith.constant 1 : i32
    %12 = arith.addi %1, %c1_i32 : i32
    %c0_6 = arith.constant 0 : index
    %13 = arith.index_cast %12 : i32 to index
    %c0_7 = arith.constant 0 : index
    %c0_8 = arith.constant 0 : index
    %14 = vector.load %arg3[%c0_6, %13, %c0_7, %c0_8] : memref<1x18x16x48xbf16, #tpu.memory_space<vmem>>, vector<1x16x16x48xbf16>
    %15 = vector.shape_cast %14 : vector<1x16x16x48xbf16> to vector<16x16x48xbf16>
    %16 = vector.shape_cast %15 : vector<16x16x48xbf16> to vector<256x48xbf16>
    %c1 = arith.constant 1 : index
    %c0_9 = arith.constant 0 : index
    %c0_10 = arith.constant 0 : index
    %17 = vector.load %arg4[%c1, %c0_9, %c0_10] : memref<3x48x128xbf16, #tpu.memory_space<vmem>>, vector<1x48x128xbf16>
    %18 = vector.shape_cast %17 : vector<1x48x128xbf16> to vector<48x128xbf16>
    %cst_11 = arith.constant dense<0.000000e+00> : vector<256x128xf32>
    %19 = tpu.matmul %16, %18, %cst_11 {dimension_numbers = #tpu.dot_dimension_numbers<[1], [0], [0], [1], [0, 0, 1, 1], [], []>} : vector<256x48xbf16>, vector<48x128xbf16>, vector<256x128xf32> -> vector<256x128xf32>
    %20 = arith.addf %11, %19 : vector<256x128xf32>
    %c2_i32 = arith.constant 2 : i32
    %21 = arith.addi %1, %c2_i32 : i32
    %c0_12 = arith.constant 0 : index
    %22 = arith.index_cast %21 : i32 to index
    %c0_13 = arith.constant 0 : index
    %c0_14 = arith.constant 0 : index
    %23 = vector.load %arg3[%c0_12, %22, %c0_13, %c0_14] : memref<1x18x16x48xbf16, #tpu.memory_space<vmem>>, vector<1x16x16x48xbf16>
    %24 = vector.shape_cast %23 : vector<1x16x16x48xbf16> to vector<16x16x48xbf16>
    %25 = vector.shape_cast %24 : vector<16x16x48xbf16> to vector<256x48xbf16>
    %c2 = arith.constant 2 : index
    %c0_15 = arith.constant 0 : index
    %c0_16 = arith.constant 0 : index
    %26 = vector.load %arg4[%c2, %c0_15, %c0_16] : memref<3x48x128xbf16, #tpu.memory_space<vmem>>, vector<1x48x128xbf16>
    %27 = vector.shape_cast %26 : vector<1x48x128xbf16> to vector<48x128xbf16>
    %cst_17 = arith.constant dense<0.000000e+00> : vector<256x128xf32>
    %28 = tpu.matmul %25, %27, %cst_17 {dimension_numbers = #tpu.dot_dimension_numbers<[1], [0], [0], [1], [0, 0, 1, 1], [], []>} : vector<256x48xbf16>, vector<48x128xbf16>, vector<256x128xf32> -> vector<256x128xf32>
    %29 = arith.addf %20, %28 : vector<256x128xf32>
    %c0_18 = arith.constant 0 : index
    %c0_19 = arith.constant 0 : index
    %30 = vector.load %arg5[%c0_18, %c0_19] : memref<1x128xf32, #tpu.memory_space<vmem>>, vector<1x128xf32>
    %31 = vector.broadcast %30 : vector<1x128xf32> to vector<256x128xf32>
    %32 = arith.addf %29, %31 : vector<256x128xf32>
    %33 = vector.shape_cast %32 : vector<256x128xf32> to vector<1x16x16x128xf32>
    %34 = arith.truncf %33 : vector<1x16x16x128xf32> to vector<1x16x16x128xbf16>
    %c0_20 = arith.constant 0 : index
    %c0_21 = arith.constant 0 : index
    %c0_22 = arith.constant 0 : index
    %c0_23 = arith.constant 0 : index
    %35 = vector.load %arg6[%c0_20, %c0_21, %c0_22, %c0_23] : memref<1x16x16x128xbf16, #tpu.memory_space<vmem>>, vector<1x16x16x128xbf16>
    tpu.vector_store %arg6[%c0_20, %c0_21, %c0_22, %c0_23], %34 {strides = array<i32>} : memref<1x16x16x128xbf16, #tpu.memory_space<vmem>>, vector<1x16x16x128xbf16>,
    return
  }
  func.func @transform_0(%arg0: i32, %arg1: i32, %arg2: i32) -> (i32, i32, i32, i32) {
    %c0_i32 = arith.constant 0 : i32
    %c0_i32_0 = arith.constant 0 : i32
    %c0_i32_1 = arith.constant 0 : i32
    %c0_i32_2 = arith.constant 0 : i32
    return %arg0, %c0_i32, %c0_i32_0, %c0_i32_1 : i32, i32, i32, i32
  }
  func.func @transform_1(%arg0: i32, %arg1: i32, %arg2: i32) -> (i32, i32, i32) {
    %c0_i32 = arith.constant 0 : i32
    %c0_i32_0 = arith.constant 0 : i32
    %c0_i32_1 = arith.constant 0 : i32
    return %c0_i32, %c0_i32_0, %arg1 : i32, i32, i32
  }
  func.func @transform_2(%arg0: i32, %arg1: i32, %arg2: i32) -> (i32, i32) {
    %c0_i32 = arith.constant 0 : i32
    %c0_i32_0 = arith.constant 0 : i32
    return %c0_i32, %arg1 : i32, i32
  }
  func.func @transform_3(%arg0: i32, %arg1: i32, %arg2: i32) -> (i32, i32, i32, i32) {
    %c0_i32 = arith.constant 0 : i32
    %c0_i32_0 = arith.constant 0 : i32
    return %arg0, %arg2, %c0_i32, %arg1 : i32, i32, i32, i32
  }
}

</mosaic_0001>

<llo_original>
// kernel: tpu_custom_call.1
$region0: #{tpu_custom_call.1}
  #allocation0 [shape = 'u32[]', space=smem, size = 0x4, offset = 0x4, fixed_abs, tag = 'smem constant byte address 0x4 - core index']
  #allocation1 [shape = 'u32[72,128]{1,0:T(1,128)}', space=vmem, size = 0x9000, scoped, tag = 'internal scratch']
  %s0 = inlined_call_operand.hbm [shape: f32[8,128], index: 0, kind: input, shape index: {}]
  %s1 = inlined_call_operand.hbm [shape: f32[8,128], index: 1, kind: output, shape index: {}]
  %s2 = sld [smem:[#allocation0]]
  $region41: #{tpu_custom_call.1} parent=0
    _
  %s4 = ssub.s32 1, %s2
  %s5 = scalar_select 0, %s4, %s2
  $region1: #{tpu_custom_call.1} parent=0
    #allocation2 [shape = 'u8[4096]{0}', space=vmem, size = 0x1000, scoped, tag = 'input window, operand 0, single buffered']
    #allocation3 [shape = 's32[2]{0}', space=sflag, size = 0x8, scoped, tag = 'scoped memory for tpu_custom_call.1']
    #allocation4 [shape = 's32[2]{0}', space=sflag, size = 0x8, scoped, tag = 'scoped memory for tpu_custom_call.1']
    #allocation5 [shape = 'u8[4096]{0}', space=vmem, size = 0x1000, scoped, tag = 'output window, operand 0, single buffered']
    %6 = vsyncpa [#allocation3], 0
    %7 = vsyncpa [#allocation4], 0
    loop: start=0, step=1, limit=4
    $region2: #{tpu_custom_call.1} parent=1 // loop_pre_header
      _
    $region3: #{tpu_custom_call.1} parent=1 // loop_header
      %s9 = sphi 0, %s13
      %p10 = scmp.ge.s32.totalorder %s9, 4
      %s17 = sphi 0, %s17
      %s19 = sphi 0, %s17
      %s20 = sphi 0, %s19
      %s34 = sphi 0, %s20
      %s38 = sphi 0, %s38
      %s40 = sphi 0, %s38
      %s41 = sphi 0, %s40
      %s55 = sphi 0, %s41
    $region4: #{tpu_custom_call.1} parent=1 // loop_header_branch
      %12 = sbr.rel (%p10) target = $region8
    $region5: #{tpu_custom_call.1} parent=1 // loop_body
      %s14 = ssub.s32 %s9, 1
      %s15 = ssub.s32 %s9, 2
      %s16 = sadd.s32 %s9, 1
      %s18 = sadd.s32 %s17, 1
      %p21 = scmp.eq.s32.totalorder %s9, 1
      %p22 = scmp.ne.s32.totalorder %s17, %s19
      %p23 = scmp.eq.s32.totalorder %s9, 0
      %p24 = por %p22, %p23
      %p25 = scmp.ne.s32.totalorder %s17, %s19
      %p26 = scmp.eq.s32.totalorder %s14, 1
      %p27 = por %p25, %p26
      %p28 = scmp.ne.s32.totalorder %s19, %s20
      %p29 = scmp.eq.s32.totalorder %s14, 0
      %p30 = por %p28, %p29
      %p31 = scmp.ne.s32.totalorder %s19, %s20
      %p32 = scmp.eq.s32.totalorder %s15, 1
      %p33 = por %p31, %p32
      %p35 = scmp.ne.s32.totalorder %s20, %s34
      %p36 = scmp.eq.s32.totalorder %s15, 0
      %p37 = por %p35, %p36
      %s39 = sadd.s32 %s38, 1
      %p42 = scmp.eq.s32.totalorder %s9, 1
      %p43 = scmp.ne.s32.totalorder %s38, %s40
      %p44 = scmp.eq.s32.totalorder %s9, 0
      %p45 = por %p43, %p44
      %p46 = scmp.ne.s32.totalorder %s38, %s40
      %p47 = scmp.eq.s32.totalorder %s14, 1
      %p48 = por %p46, %p47
      %p49 = scmp.ne.s32.totalorder %s40, %s41
      %p50 = scmp.eq.s32.totalorder %s14, 0
      %p51 = por %p49, %p50
      %p52 = scmp.ne.s32.totalorder %s40, %s41
      %p53 = scmp.eq.s32.totalorder %s15, 1
      %p54 = por %p52, %p53
      %p56 = scmp.ne.s32.totalorder %s41, %s55
      %p57 = scmp.eq.s32.totalorder %s15, 0
      %p58 = por %p56, %p57
      %p59 = scmp.le.s32.totalorder 1, %s9
      %p60 = scmp.lt.s32.totalorder %s9, 3
      %p61 = pnand %p59, %p60
      %p62 = pneg %p61
      // Predicated region
      $region9: #{tpu_custom_call.1} parent=5 // pred_check
        _
      $region10: #{tpu_custom_call.1} parent=5 // pred_check_branch
        %64 = sbr.rel (%p61) target = $region12
      $region11: #{tpu_custom_call.1} parent=5 // pred_region
        %s65 = ssub.s32 %s9, 1
        // Predicated region
        $region13: #{tpu_custom_call.1} parent=11 // pred_check
          %p66 = pneg %p30
        $region14: #{tpu_custom_call.1} parent=11 // pred_check_branch
          %68 = sbr.rel (%p66) target = $region16
        $region15: #{tpu_custom_call.1} parent=11 // pred_region
          %70 = vsyncadd [#allocation3], 0
          %s72 = sshll.u32 %s0, 4
          %s73 = int_to_ptr.hbm [resolvable:$true] %s72
          %s74 = sshll.u32 [#allocation2], 4
          %s75 = int_to_ptr.vmem [resolvable:$true] %s74
          %77 = dma.hbm_to_vmem [thread:$0]  %s73, 128, %s75, [#allocation3]
        $region16: #{tpu_custom_call.1} parent=11 // pred_fallthru
          _
      $region12: #{tpu_custom_call.1} parent=5 // pred_fallthru
        _
      %p78 = scmp.lt.s32.totalorder %s9, 2
      // Predicated region
      $region17: #{tpu_custom_call.1} parent=5 // pred_check
        %p79 = pneg %p78
      $region18: #{tpu_custom_call.1} parent=5 // pred_check_branch
        %81 = sbr.rel (%p79) target = $region20
      $region19: #{tpu_custom_call.1} parent=5 // pred_region
        _
      $region20: #{tpu_custom_call.1} parent=5 // pred_fallthru
        _
      %p82 = scmp.le.s32.totalorder 1, %s9
      %p83 = scmp.lt.s32.totalorder %s9, 3
      %p84 = pnand %p82, %p83
      %p85 = pneg %p84
      // Predicated region
      $region21: #{tpu_custom_call.1} parent=5 // pred_check
        _
      $region22: #{tpu_custom_call.1} parent=5 // pred_check_branch
        %87 = sbr.rel (%p84) target = $region24
      $region23: #{tpu_custom_call.1} parent=5 // pred_region
        %s88 = ssub.s32 %s9, 1
        // Predicated region
        $region25: #{tpu_custom_call.1} parent=23 // pred_check
          %p89 = pneg %p30
        $region26: #{tpu_custom_call.1} parent=23 // pred_check_branch
          %91 = sbr.rel (%p89) target = $region28
        $region27: #{tpu_custom_call.1} parent=23 // pred_region
          %93 = dma.done [#allocation3], 128
        $region28: #{tpu_custom_call.1} parent=23 // pred_fallthru
          _
        %p94 = pneg %p30
        %p95 = pneg %p27
        %p96 = pneg %p51
        %p97 = pneg %p48
        %v98 = vld [vmem:[#allocation2] sm:$0xff]
        %99 = vst [vmem:[#allocation5] sm:$0xff] %v98
        // Predicated region
        $region29: #{tpu_custom_call.1} parent=23 // pred_check
          %p100 = pneg %p48
        $region30: #{tpu_custom_call.1} parent=23 // pred_check_branch
          %102 = sbr.rel (%p100) target = $region32
        $region31: #{tpu_custom_call.1} parent=23 // pred_region
          %104 = vsyncadd [#allocation4], 0
          %s106 = sshll.u32 [#allocation5], 4
          %s107 = int_to_ptr.vmem [resolvable:$true] %s106
          %s108 = sshll.u32 %s1, 4
          %s109 = int_to_ptr.hbm [resolvable:$true] %s108
          %111 = dma.vmem_to_hbm [thread:$0]  %s107, 128, %s109, [#allocation4]
        $region32: #{tpu_custom_call.1} parent=23 // pred_fallthru
          _
        // Predicated region
        $region33: #{tpu_custom_call.1} parent=23 // pred_check
          %p112 = pneg %p48
        $region34: #{tpu_custom_call.1} parent=23 // pred_check_branch
          %114 = sbr.rel (%p112) target = $region36
        $region35: #{tpu_custom_call.1} parent=23 // pred_region
          %116 = dma.done [#allocation4], 128
        $region36: #{tpu_custom_call.1} parent=23 // pred_fallthru
          _
      $region24: #{tpu_custom_call.1} parent=5 // pred_fallthru
        _
      %p117 = scmp.le.s32.totalorder 2, %s9
      // Predicated region
      $region37: #{tpu_custom_call.1} parent=5 // pred_check
        %p118 = pneg %p117
      $region38: #{tpu_custom_call.1} parent=5 // pred_check_branch
        %120 = sbr.rel (%p118) target = $region40
      $region39: #{tpu_custom_call.1} parent=5 // pred_region
        %s121 = ssub.s32 %s9, 2
      $region40: #{tpu_custom_call.1} parent=5 // pred_fallthru
        _
    $region6: #{tpu_custom_call.1} parent=1 // loop_footer
      %s13 = sadd.s32 1, %s9
    $region7: #{tpu_custom_call.1} parent=1 // loop_footer_branch
      %8 = sbr.rel target = $region3
    $region8: #{tpu_custom_call.1} parent=1 // loop_exit
      _
    %122 = vsyncpa [#allocation3], 1
    %s123 = scalar_lea.sflag [#allocation3], 1
    %124 = vsyncpa %s123, 1
    %125 = vsyncpa [#allocation4], 1
    %s126 = scalar_lea.sflag [#allocation4], 1
    %127 = vsyncpa %s126, 1

// kernel: modulated_conv2d2_forward.1
$region0: #{modulated_conv2d2_forward.1}
  #allocation0 [shape = 'u32[]', space=smem, size = 0x4, offset = 0x4, fixed_abs, tag = 'smem constant byte address 0x4 - core index']
  #allocation1 [shape = 'u32[72,128]{1,0:T(1,128)}', space=vmem, size = 0x9000, scoped, tag = 'internal scratch']
  %s0 = inlined_call_operand.vmem [shape: bf16[1,18,16,48], index: 0, kind: input, shape index: {}]
  %s1 = inlined_call_operand.vmem [shape: bf16[3,48,128], index: 1, kind: input, shape index: {}]
  %s2 = inlined_call_operand.vmem [shape: f32[1,128], index: 2, kind: input, shape index: {}]
  %s3 = inlined_call_operand.vmem [shape: bf16[1,16,16,128], index: 3, kind: output, shape index: {}]
  %s4 = sld [smem:[#allocation0]]
  $region22: #{modulated_conv2d2_forward.1} parent=0
    _
  %s6 = ssub.s32 1, %s4
  %s7 = scalar_select 0, %s6, %s4
  // Predicated region
  $region2: #{modulated_conv2d2_forward.1} parent=0 // pred_check
    _
  $region3: #{modulated_conv2d2_forward.1} parent=0 // pred_check_branch
    %9 = sbr.rel (0) target = $region5
  $region4: #{modulated_conv2d2_forward.1} parent=0 // pred_region
    _
  $region5: #{modulated_conv2d2_forward.1} parent=0 // pred_fallthru
    _
  // Predicated region
  $region6: #{modulated_conv2d2_forward.1} parent=0 // pred_check
    _
  $region7: #{modulated_conv2d2_forward.1} parent=0 // pred_check_branch
    %11 = sbr.rel (0) target = $region9
  $region8: #{modulated_conv2d2_forward.1} parent=0 // pred_region
    _
  $region9: #{modulated_conv2d2_forward.1} parent=0 // pred_fallthru
    _
  // Predicated region
  $region10: #{modulated_conv2d2_forward.1} parent=0 // pred_check
    _
  $region11: #{modulated_conv2d2_forward.1} parent=0 // pred_check_branch
    %13 = sbr.rel (0) target = $region13
  $region12: #{modulated_conv2d2_forward.1} parent=0 // pred_region
    _
  $region13: #{modulated_conv2d2_forward.1} parent=0 // pred_fallthru
    _
  %s15 = smul.u32 0, 16
  %s16 = smul.u32 %s15, 2
  %s17 = smul.addr %s16, 4
  %s18 = scalar_lea.vmem %s0, %s17
  %v19 = vld [vmem:[%s18] sm:$0xf]
  %v20 = vld [vmem:[%s18 + $0x4] sm:$0xf]
  %v21 = vld [vmem:[%s18 + $0x8] sm:$0xf]
  %v22 = vld [vmem:[%s18 + $0xc] sm:$0xf]
  %v23 = vld [vmem:[%s18 + $0x10] sm:$0xf]
  %v24 = vld [vmem:[%s18 + $0x14] sm:$0xf]
  %v25 = vld [vmem:[%s18 + $0x18] sm:$0xf]
  %v26 = vld [vmem:[%s18 + $0x1c] sm:$0xf]
  %v27 = vld [vmem:[%s18 + $0x20] sm:$0xf]
  %v28 = vld [vmem:[%s18 + $0x24] sm:$0xf]
  %v29 = vld [vmem:[%s18 + $0x28] sm:$0xf]
  %v30 = vld [vmem:[%s18 + $0x2c] sm:$0xf]
  %v31 = vld [vmem:[%s18 + $0x30] sm:$0xf]
  %v32 = vld [vmem:[%s18 + $0x34] sm:$0xf]
  %v33 = vld [vmem:[%s18 + $0x38] sm:$0xf]
  %v34 = vld [vmem:[%s18 + $0x3c] sm:$0xf]
  %v35 = vld [vmem:[%s18 + $0x40] sm:$0xf]
  %v36 = vld [vmem:[%s18 + $0x44] sm:$0xf]
  %v37 = vld [vmem:[%s18 + $0x48] sm:$0xf]
  %v38 = vld [vmem:[%s18 + $0x4c] sm:$0xf]
  %v39 = vld [vmem:[%s18 + $0x50] sm:$0xf]
  %v40 = vld [vmem:[%s18 + $0x54] sm:$0xf]
  %v41 = vld [vmem:[%s18 + $0x58] sm:$0xf]
  %v42 = vld [vmem:[%s18 + $0x5c] sm:$0xf]
  %v43 = vld [vmem:[%s18 + $0x60] sm:$0xf]
  %v44 = vld [vmem:[%s18 + $0x64] sm:$0xf]
  %v45 = vld [vmem:[%s18 + $0x68] sm:$0xf]
  %v46 = vld [vmem:[%s18 + $0x6c] sm:$0xf]
  %v47 = vld [vmem:[%s18 + $0x70] sm:$0xf]
  %v48 = vld [vmem:[%s18 + $0x74] sm:$0xf]
  %v49 = vld [vmem:[%s18 + $0x78] sm:$0xf]
  %v50 = vld [vmem:[%s18 + $0x7c] sm:$0xf]
  %v51 = vld [vmem:[%s1] sm:$0xf]
  %v52 = vld [vmem:[%s1 + $0x4] sm:$0xf]
  %v53 = vld [vmem:[%s1 + $0x8] sm:$0xf]
  %v54 = vld [vmem:[%s1 + $0xc] sm:$0xf]
  %v55 = vld [vmem:[%s1 + $0x10] sm:$0xf]
  %v56 = vld [vmem:[%s1 + $0x14] sm:$0xf]
  %s57 = sadd.s32 %s15, 1
  %s58 = smul.u32 %s57, 2
  %s59 = smul.addr %s58, 4
  %s60 = scalar_lea.vmem %s0, %s59
  %v61 = vld [vmem:[%s60] sm:$0xf]
  %v62 = vld [vmem:[%s60 + $0x4] sm:$0xf]
  %v63 = vld [vmem:[%s60 + $0x8] sm:$0xf]
  %v64 = vld [vmem:[%s60 + $0xc] sm:$0xf]
  %v65 = vld [vmem:[%s60 + $0x10] sm:$0xf]
  %v66 = vld [vmem:[%s60 + $0x14] sm:$0xf]
  %v67 = vld [vmem:[%s60 + $0x18] sm:$0xf]
  %v68 = vld [vmem:[%s60 + $0x1c] sm:$0xf]
  %v69 = vld [vmem:[%s60 + $0x20] sm:$0xf]
  %v70 = vld [vmem:[%s60 + $0x24] sm:$0xf]
  %v71 = vld [vmem:[%s60 + $0x28] sm:$0xf]
  %v72 = vld [vmem:[%s60 + $0x2c] sm:$0xf]
  %v73 = vld [vmem:[%s60 + $0x30] sm:$0xf]
  %v74 = vld [vmem:[%s60 + $0x34] sm:$0xf]
  %v75 = vld [vmem:[%s60 + $0x38] sm:$0xf]
  %v76 = vld [vmem:[%s60 + $0x3c] sm:$0xf]
  %v77 = vld [vmem:[%s60 + $0x40] sm:$0xf]
  %v78 = vld [vmem:[%s60 + $0x44] sm:$0xf]
  %v79 = vld [vmem:[%s60 + $0x48] sm:$0xf]
  %v80 = vld [vmem:[%s60 + $0x4c] sm:$0xf]
  %v81 = vld [vmem:[%s60 + $0x50] sm:$0xf]
  %v82 = vld [vmem:[%s60 + $0x54] sm:$0xf]
  %v83 = vld [vmem:[%s60 + $0x58] sm:$0xf]
  %v84 = vld [vmem:[%s60 + $0x5c] sm:$0xf]
  %v85 = vld [vmem:[%s60 + $0x60] sm:$0xf]
  %v86 = vld [vmem:[%s60 + $0x64] sm:$0xf]
  %v87 = vld [vmem:[%s60 + $0x68] sm:$0xf]
  %v88 = vld [vmem:[%s60 + $0x6c] sm:$0xf]
  %v89 = vld [vmem:[%s60 + $0x70] sm:$0xf]
  %v90 = vld [vmem:[%s60 + $0x74] sm:$0xf]
  %v91 = vld [vmem:[%s60 + $0x78] sm:$0xf]
  %v92 = vld [vmem:[%s60 + $0x7c] sm:$0xf]
  %s93 = scalar_lea.vmem %s1, 24
  %v94 = vld [vmem:[%s93] sm:$0xf]
  %v95 = vld [vmem:[%s93 + $0x4] sm:$0xf]
  %v96 = vld [vmem:[%s93 + $0x8] sm:$0xf]
  %v97 = vld [vmem:[%s93 + $0xc] sm:$0xf]
  %v98 = vld [vmem:[%s93 + $0x10] sm:$0xf]
  %v99 = vld [vmem:[%s93 + $0x14] sm:$0xf]
  %v132 = vunpack.c.l.b16 %v61
  %v133 = vunpack.c.l.b16 %v62
  %v134 = vunpack.c.l.b16 %v63
  %v135 = vunpack.c.l.b16 %v64
  %v136 = vunpack.c.l.b16 %v65
  %v137 = vunpack.c.l.b16 %v66
  %v138 = vunpack.c.l.b16 %v67
  %v139 = vunpack.c.l.b16 %v68
  %v140 = vunpack.c.l.b16 %v69
  %v141 = vunpack.c.l.b16 %v70
  %v142 = vunpack.c.l.b16 %v71
  %v143 = vunpack.c.l.b16 %v72
  %v144 = vunpack.c.l.b16 %v73
  %v145 = vunpack.c.l.b16 %v74
  %v146 = vunpack.c.l.b16 %v75
  %v147 = vunpack.c.l.b16 %v76
  %v148 = vunpack.c.l.b16 %v77
  %v149 = vunpack.c.l.b16 %v78
  %v150 = vunpack.c.l.b16 %v79
  %v151 = vunpack.c.l.b16 %v80
  %v152 = vunpack.c.l.b16 %v81
  %v153 = vunpack.c.l.b16 %v82
  %v154 = vunpack.c.l.b16 %v83
  %v155 = vunpack.c.l.b16 %v84
  %v156 = vunpack.c.l.b16 %v85
  %v157 = vunpack.c.l.b16 %v86
  %v158 = vunpack.c.l.b16 %v87
  %v159 = vunpack.c.l.b16 %v88
  %v160 = vunpack.c.l.b16 %v89
  %v161 = vunpack.c.l.b16 %v90
  %v162 = vunpack.c.l.b16 %v91
  %v163 = vunpack.c.l.b16 %v92
  %v164 = vpack.c.b16 %v133, %v132
  %v165 = vpack.c.b16 %v135, %v134
  %v166 = vpack.c.b16 %v137, %v136
  %v167 = vpack.c.b16 %v139, %v138
  %v168 = vpack.c.b16 %v141, %v140
  %v169 = vpack.c.b16 %v143, %v142
  %v170 = vpack.c.b16 %v145, %v144
  %v171 = vpack.c.b16 %v147, %v146
  %v172 = vpack.c.b16 %v149, %v148
  %v173 = vpack.c.b16 %v151, %v150
  %v174 = vpack.c.b16 %v153, %v152
  %v175 = vpack.c.b16 %v155, %v154
  %v176 = vpack.c.b16 %v157, %v156
  %v177 = vpack.c.b16 %v159, %v158
  %v178 = vpack.c.b16 %v161, %v160
  %v179 = vpack.c.b16 %v163, %v162
  %v186 = vunpack.c.l.b16 %v94
  %v187 = vunpack.c.l.b16 %v95
  %v188 = vunpack.c.l.b16 %v96
  %v189 = vunpack.c.l.b16 %v97
  %v190 = vunpack.c.l.b16 %v98
  %v191 = vunpack.c.l.b16 %v99
  %v192 = vpack.c.b16 %v187, %v186
  %v193 = vpack.c.b16 %v189, %v188
  %v194 = vpack.c.b16 %v191, %v190
  %vm198 = vcmask 392192
  %v200 = vsel %vm198, %v164, 0
  %v203 = vsel %vm198, %v165, 0
  %v206 = vsel %vm198, %v166, 0
  %v209 = vsel %vm198, %v167, 0
  %v212 = vsel %vm198, %v168, 0
  %v215 = vsel %vm198, %v169, 0
  %v218 = vsel %vm198, %v170, 0
  %v221 = vsel %vm198, %v171, 0
  %v224 = vsel %vm198, %v172, 0
  %v227 = vsel %vm198, %v173, 0
  %v230 = vsel %vm198, %v174, 0
  %v233 = vsel %vm198, %v175, 0
  %v236 = vsel %vm198, %v176, 0
  %v239 = vsel %vm198, %v177, 0
  %v242 = vsel %vm198, %v178, 0
  %v245 = vsel %vm198, %v179, 0
  %247 = vmatpush.bf16.msra.mxu0 0
  %248 = vmatpush.bf16.msra.mxu0 0
  %249 = vmatpush.bf16.msra.mxu0 0
  %250 = vmatpush.bf16.msra.mxu0 0
  %251 = vmatpush.bf16.msra.mxu0 0
  %252 = vmatpush.bf16.msra.mxu0 %v194
  %253 = vmatpush.bf16.msra.mxu0 %v193
  %254 = vmatpush.bf16.msra.mxu0 %v192
  %255 = vmatmul.bf16.gmra.mxu0 %v200
  %v256 = vpop.f32.mrf.mxu0
  %v257 = vadd.f32 0.0, %v256
  %v258 = vpop.f32.mrf.mxu0
  %v259 = vadd.f32 0.0, %v258
  %260 = vmatmul.bf16.gmra.mxu0 %v203
  %v261 = vpop.f32.mrf.mxu0
  %v262 = vadd.f32 0.0, %v261
  %v263 = vpop.f32.mrf.mxu0
  %v264 = vadd.f32 0.0, %v263
  %265 = vmatmul.bf16.gmra.mxu0 %v206
  %v266 = vpop.f32.mrf.mxu0
  %v267 = vadd.f32 0.0, %v266
  %v268 = vpop.f32.mrf.mxu0
  %v269 = vadd.f32 0.0, %v268
  %270 = vmatmul.bf16.gmra.mxu0 %v209
  %v271 = vpop.f32.mrf.mxu0
  %v272 = vadd.f32 0.0, %v271
  %v273 = vpop.f32.mrf.mxu0
  %v274 = vadd.f32 0.0, %v273
  %275 = vmatmul.bf16.gmra.mxu0 %v212
  %v276 = vpop.f32.mrf.mxu0
  %v277 = vadd.f32 0.0, %v276
  %v278 = vpop.f32.mrf.mxu0
  %v279 = vadd.f32 0.0, %v278
  %280 = vmatmul.bf16.gmra.mxu0 %v215
  %v281 = vpop.f32.mrf.mxu0
  %v282 = vadd.f32 0.0, %v281
  %v283 = vpop.f32.mrf.mxu0
  %v284 = vadd.f32 0.0, %v283
  %285 = vmatmul.bf16.gmra.mxu0 %v218
  %v286 = vpop.f32.mrf.mxu0
  %v287 = vadd.f32 0.0, %v286
  %v288 = vpop.f32.mrf.mxu0
  %v289 = vadd.f32 0.0, %v288
  %290 = vmatmul.bf16.gmra.mxu0 %v221
  %v291 = vpop.f32.mrf.mxu0
  %v292 = vadd.f32 0.0, %v291
  %v293 = vpop.f32.mrf.mxu0
  %v294 = vadd.f32 0.0, %v293
  %295 = vmatmul.bf16.gmra.mxu0 %v224
  %v296 = vpop.f32.mrf.mxu0
  %v297 = vadd.f32 0.0, %v296
  %v298 = vpop.f32.mrf.mxu0
  %v299 = vadd.f32 0.0, %v298
  %300 = vmatmul.bf16.gmra.mxu0 %v227
  %v301 = vpop.f32.mrf.mxu0
  %v302 = vadd.f32 0.0, %v301
  %v303 = vpop.f32.mrf.mxu0
  %v304 = vadd.f32 0.0, %v303
  %305 = vmatmul.bf16.gmra.mxu0 %v230
  %v306 = vpop.f32.mrf.mxu0
  %v307 = vadd.f32 0.0, %v306
  %v308 = vpop.f32.mrf.mxu0
  %v309 = vadd.f32 0.0, %v308
  %310 = vmatmul.bf16.gmra.mxu0 %v233
  %v311 = vpop.f32.mrf.mxu0
  %v312 = vadd.f32 0.0, %v311
  %v313 = vpop.f32.mrf.mxu0
  %v314 = vadd.f32 0.0, %v313
  %315 = vmatmul.bf16.gmra.mxu0 %v236
  %v316 = vpop.f32.mrf.mxu0
  %v317 = vadd.f32 0.0, %v316
  %v318 = vpop.f32.mrf.mxu0
  %v319 = vadd.f32 0.0, %v318
  %320 = vmatmul.bf16.gmra.mxu0 %v239
  %v321 = vpop.f32.mrf.mxu0
  %v322 = vadd.f32 0.0, %v321
  %v323 = vpop.f32.mrf.mxu0
  %v324 = vadd.f32 0.0, %v323
  %325 = vmatmul.bf16.gmra.mxu0 %v242
  %v326 = vpop.f32.mrf.mxu0
  %v327 = vadd.f32 0.0, %v326
  %v328 = vpop.f32.mrf.mxu0
  %v329 = vadd.f32 0.0, %v328
  %330 = vmatmul.bf16.gmra.mxu0 %v245
  %v331 = vpop.f32.mrf.mxu0
  %v332 = vadd.f32 0.0, %v331
  %v333 = vpop.f32.mrf.mxu0
  %v334 = vadd.f32 0.0, %v333
  %335 = vdwg.mxu0
  %v368 = vunpack.c.l.b16 %v19
  %v369 = vunpack.c.l.b16 %v20
  %v370 = vunpack.c.l.b16 %v21
  %v371 = vunpack.c.l.b16 %v22
  %v372 = vunpack.c.l.b16 %v23
  %v373 = vunpack.c.l.b16 %v24
  %v374 = vunpack.c.l.b16 %v25
  %v375 = vunpack.c.l.b16 %v26
  %v376 = vunpack.c.l.b16 %v27
  %v377 = vunpack.c.l.b16 %v28
  %v378 = vunpack.c.l.b16 %v29
  %v379 = vunpack.c.l.b16 %v30
  %v380 = vunpack.c.l.b16 %v31
  %v381 = vunpack.c.l.b16 %v32
  %v382 = vunpack.c.l.b16 %v33
  %v383 = vunpack.c.l.b16 %v34
  %v384 = vunpack.c.l.b16 %v35
  %v385 = vunpack.c.l.b16 %v36
  %v386 = vunpack.c.l.b16 %v37
  %v387 = vunpack.c.l.b16 %v38
  %v388 = vunpack.c.l.b16 %v39
  %v389 = vunpack.c.l.b16 %v40
  %v390 = vunpack.c.l.b16 %v41
  %v391 = vunpack.c.l.b16 %v42
  %v392 = vunpack.c.l.b16 %v43
  %v393 = vunpack.c.l.b16 %v44
  %v394 = vunpack.c.l.b16 %v45
  %v395 = vunpack.c.l.b16 %v46
  %v396 = vunpack.c.l.b16 %v47
  %v397 = vunpack.c.l.b16 %v48
  %v398 = vunpack.c.l.b16 %v49
  %v399 = vunpack.c.l.b16 %v50
  %v400 = vpack.c.b16 %v369, %v368
  %v401 = vpack.c.b16 %v371, %v370
  %v402 = vpack.c.b16 %v373, %v372
  %v403 = vpack.c.b16 %v375, %v374
  %v404 = vpack.c.b16 %v377, %v376
  %v405 = vpack.c.b16 %v379, %v378
  %v406 = vpack.c.b16 %v381, %v380
  %v407 = vpack.c.b16 %v383, %v382
  %v408 = vpack.c.b16 %v385, %v384
  %v409 = vpack.c.b16 %v387, %v386
  %v410 = vpack.c.b16 %v389, %v388
  %v411 = vpack.c.b16 %v391, %v390
  %v412 = vpack.c.b16 %v393, %v392
  %v413 = vpack.c.b16 %v395, %v394
  %v414 = vpack.c.b16 %v397, %v396
  %v415 = vpack.c.b16 %v399, %v398
  %v422 = vunpack.c.l.b16 %v51
  %v423 = vunpack.c.l.b16 %v52
  %v424 = vunpack.c.l.b16 %v53
  %v425 = vunpack.c.l.b16 %v54
  %v426 = vunpack.c.l.b16 %v55
  %v427 = vunpack.c.l.b16 %v56
  %v428 = vpack.c.b16 %v423, %v422
  %v429 = vpack.c.b16 %v425, %v424
  %v430 = vpack.c.b16 %v427, %v426
  %v435 = vsel %vm198, %v400, 0
  %v438 = vsel %vm198, %v401, 0
  %v441 = vsel %vm198, %v402, 0
  %v444 = vsel %vm198, %v403, 0
  %v447 = vsel %vm198, %v404, 0
  %v450 = vsel %vm198, %v405, 0
  %v453 = vsel %vm198, %v406, 0
  %v456 = vsel %vm198, %v407, 0
  %v459 = vsel %vm198, %v408, 0
  %v462 = vsel %vm198, %v409, 0
  %v465 = vsel %vm198, %v410, 0
  %v468 = vsel %vm198, %v411, 0
  %v471 = vsel %vm198, %v412, 0
  %v474 = vsel %vm198, %v413, 0
  %v477 = vsel %vm198, %v414, 0
  %v480 = vsel %vm198, %v415, 0
  %482 = vmatpush.bf16.msra.mxu0 0
  %483 = vmatpush.bf16.msra.mxu0 0
  %484 = vmatpush.bf16.msra.mxu0 0
  %485 = vmatpush.bf16.msra.mxu0 0
  %486 = vmatpush.bf16.msra.mxu0 0
  %487 = vmatpush.bf16.msra.mxu0 %v430
  %488 = vmatpush.bf16.msra.mxu0 %v429
  %489 = vmatpush.bf16.msra.mxu0 %v428
  %490 = vmatmul.bf16.gmra.mxu0 %v435
  %v491 = vpop.f32.mrf.mxu0
  %v492 = vadd.f32 %v257, %v491
  %v493 = vpop.f32.mrf.mxu0
  %v494 = vadd.f32 %v259, %v493
  %495 = vmatmul.bf16.gmra.mxu0 %v438
  %v496 = vpop.f32.mrf.mxu0
  %v497 = vadd.f32 %v262, %v496
  %v498 = vpop.f32.mrf.mxu0
  %v499 = vadd.f32 %v264, %v498
  %500 = vmatmul.bf16.gmra.mxu0 %v441
  %v501 = vpop.f32.mrf.mxu0
  %v502 = vadd.f32 %v267, %v501
  %v503 = vpop.f32.mrf.mxu0
  %v504 = vadd.f32 %v269, %v503
  %505 = vmatmul.bf16.gmra.mxu0 %v444
  %v506 = vpop.f32.mrf.mxu0
  %v507 = vadd.f32 %v272, %v506
  %v508 = vpop.f32.mrf.mxu0
  %v509 = vadd.f32 %v274, %v508
  %510 = vmatmul.bf16.gmra.mxu0 %v447
  %v511 = vpop.f32.mrf.mxu0
  %v512 = vadd.f32 %v277, %v511
  %v513 = vpop.f32.mrf.mxu0
  %v514 = vadd.f32 %v279, %v513
  %515 = vmatmul.bf16.gmra.mxu0 %v450
  %v516 = vpop.f32.mrf.mxu0
  %v517 = vadd.f32 %v282, %v516
  %v518 = vpop.f32.mrf.mxu0
  %v519 = vadd.f32 %v284, %v518
  %520 = vmatmul.bf16.gmra.mxu0 %v453
  %v521 = vpop.f32.mrf.mxu0
  %v522 = vadd.f32 %v287, %v521
  %v523 = vpop.f32.mrf.mxu0
  %v524 = vadd.f32 %v289, %v523
  %525 = vmatmul.bf16.gmra.mxu0 %v456
  %v526 = vpop.f32.mrf.mxu0
  %v527 = vadd.f32 %v292, %v526
  %v528 = vpop.f32.mrf.mxu0
  %v529 = vadd.f32 %v294, %v528
  %530 = vmatmul.bf16.gmra.mxu0 %v459
  %v531 = vpop.f32.mrf.mxu0
  %v532 = vadd.f32 %v297, %v531
  %v533 = vpop.f32.mrf.mxu0
  %v534 = vadd.f32 %v299, %v533
  %535 = vmatmul.bf16.gmra.mxu0 %v462
  %v536 = vpop.f32.mrf.mxu0
  %v537 = vadd.f32 %v302, %v536
  %v538 = vpop.f32.mrf.mxu0
  %v539 = vadd.f32 %v304, %v538
  %540 = vmatmul.bf16.gmra.mxu0 %v465
  %v541 = vpop.f32.mrf.mxu0
  %v542 = vadd.f32 %v307, %v541
  %v543 = vpop.f32.mrf.mxu0
  %v544 = vadd.f32 %v309, %v543
  %545 = vmatmul.bf16.gmra.mxu0 %v468
  %v546 = vpop.f32.mrf.mxu0
  %v547 = vadd.f32 %v312, %v546
  %v548 = vpop.f32.mrf.mxu0
  %v549 = vadd.f32 %v314, %v548
  %550 = vmatmul.bf16.gmra.mxu0 %v471
  %v551 = vpop.f32.mrf.mxu0
  %v552 = vadd.f32 %v317, %v551
  %v553 = vpop.f32.mrf.mxu0
  %v554 = vadd.f32 %v319, %v553
  %555 = vmatmul.bf16.gmra.mxu0 %v474
  %v556 = vpop.f32.mrf.mxu0
  %v557 = vadd.f32 %v322, %v556
  %v558 = vpop.f32.mrf.mxu0
  %v559 = vadd.f32 %v324, %v558
  %560 = vmatmul.bf16.gmra.mxu0 %v477
  %v561 = vpop.f32.mrf.mxu0
  %v562 = vadd.f32 %v327, %v561
  %v563 = vpop.f32.mrf.mxu0
  %v564 = vadd.f32 %v329, %v563
  %565 = vmatmul.bf16.gmra.mxu0 %v480
  %v566 = vpop.f32.mrf.mxu0
  %v567 = vadd.f32 %v332, %v566
  %v568 = vpop.f32.mrf.mxu0
  %v569 = vadd.f32 %v334, %v568
  %570 = vdwg.mxu0
  %s571 = sadd.s32 %s15, 2
  %s572 = smul.u32 %s571, 2
  %s573 = smul.addr %s572, 4
  %s574 = scalar_lea.vmem %s0, %s573
  %v575 = vld [vmem:[%s574] sm:$0xf]
  %v576 = vld [vmem:[%s574 + $0x4] sm:$0xf]
  %v577 = vld [vmem:[%s574 + $0x8] sm:$0xf]
  %v578 = vld [vmem:[%s574 + $0xc] sm:$0xf]
  %v579 = vld [vmem:[%s574 + $0x10] sm:$0xf]
  %v580 = vld [vmem:[%s574 + $0x14] sm:$0xf]
  %v581 = vld [vmem:[%s574 + $0x18] sm:$0xf]
  %v582 = vld [vmem:[%s574 + $0x1c] sm:$0xf]
  %v583 = vld [vmem:[%s574 + $0x20] sm:$0xf]
  %v584 = vld [vmem:[%s574 + $0x24] sm:$0xf]
  %v585 = vld [vmem:[%s574 + $0x28] sm:$0xf]
  %v586 = vld [vmem:[%s574 + $0x2c] sm:$0xf]
  %v587 = vld [vmem:[%s574 + $0x30] sm:$0xf]
  %v588 = vld [vmem:[%s574 + $0x34] sm:$0xf]
  %v589 = vld [vmem:[%s574 + $0x38] sm:$0xf]
  %v590 = vld [vmem:[%s574 + $0x3c] sm:$0xf]
  %v591 = vld [vmem:[%s574 + $0x40] sm:$0xf]
  %v592 = vld [vmem:[%s574 + $0x44] sm:$0xf]
  %v593 = vld [vmem:[%s574 + $0x48] sm:$0xf]
  %v594 = vld [vmem:[%s574 + $0x4c] sm:$0xf]
  %v595 = vld [vmem:[%s574 + $0x50] sm:$0xf]
  %v596 = vld [vmem:[%s574 + $0x54] sm:$0xf]
  %v597 = vld [vmem:[%s574 + $0x58] sm:$0xf]
  %v598 = vld [vmem:[%s574 + $0x5c] sm:$0xf]
  %v599 = vld [vmem:[%s574 + $0x60] sm:$0xf]
  %v600 = vld [vmem:[%s574 + $0x64] sm:$0xf]
  %v601 = vld [vmem:[%s574 + $0x68] sm:$0xf]
  %v602 = vld [vmem:[%s574 + $0x6c] sm:$0xf]
  %v603 = vld [vmem:[%s574 + $0x70] sm:$0xf]
  %v604 = vld [vmem:[%s574 + $0x74] sm:$0xf]
  %v605 = vld [vmem:[%s574 + $0x78] sm:$0xf]
  %v606 = vld [vmem:[%s574 + $0x7c] sm:$0xf]
  %s607 = scalar_lea.vmem %s1, 48
  %v608 = vld [vmem:[%s607] sm:$0xf]
  %v609 = vld [vmem:[%s607 + $0x4] sm:$0xf]
  %v610 = vld [vmem:[%s607 + $0x8] sm:$0xf]
  %v611 = vld [vmem:[%s607 + $0xc] sm:$0xf]
  %v612 = vld [vmem:[%s607 + $0x10] sm:$0xf]
  %v613 = vld [vmem:[%s607 + $0x14] sm:$0xf]
  %v646 = vunpack.c.l.b16 %v575
  %v647 = vunpack.c.l.b16 %v576
  %v648 = vunpack.c.l.b16 %v577
  %v649 = vunpack.c.l.b16 %v578
  %v650 = vunpack.c.l.b16 %v579
  %v651 = vunpack.c.l.b16 %v580
  %v652 = vunpack.c.l.b16 %v581
  %v653 = vunpack.c.l.b16 %v582
  %v654 = vunpack.c.l.b16 %v583
  %v655 = vunpack.c.l.b16 %v584
  %v656 = vunpack.c.l.b16 %v585
  %v657 = vunpack.c.l.b16 %v586
  %v658 = vunpack.c.l.b16 %v587
  %v659 = vunpack.c.l.b16 %v588
  %v660 = vunpack.c.l.b16 %v589
  %v661 = vunpack.c.l.b16 %v590
  %v662 = vunpack.c.l.b16 %v591
  %v663 = vunpack.c.l.b16 %v592
  %v664 = vunpack.c.l.b16 %v593
  %v665 = vunpack.c.l.b16 %v594
  %v666 = vunpack.c.l.b16 %v595
  %v667 = vunpack.c.l.b16 %v596
  %v668 = vunpack.c.l.b16 %v597
  %v669 = vunpack.c.l.b16 %v598
  %v670 = vunpack.c.l.b16 %v599
  %v671 = vunpack.c.l.b16 %v600
  %v672 = vunpack.c.l.b16 %v601
  %v673 = vunpack.c.l.b16 %v602
  %v674 = vunpack.c.l.b16 %v603
  %v675 = vunpack.c.l.b16 %v604
  %v676 = vunpack.c.l.b16 %v605
  %v677 = vunpack.c.l.b16 %v606
  %v678 = vpack.c.b16 %v647, %v646
  %v679 = vpack.c.b16 %v649, %v648
  %v680 = vpack.c.b16 %v651, %v650
  %v681 = vpack.c.b16 %v653, %v652
  %v682 = vpack.c.b16 %v655, %v654
  %v683 = vpack.c.b16 %v657, %v656
  %v684 = vpack.c.b16 %v659, %v658
  %v685 = vpack.c.b16 %v661, %v660
  %v686 = vpack.c.b16 %v663, %v662
  %v687 = vpack.c.b16 %v665, %v664
  %v688 = vpack.c.b16 %v667, %v666
  %v689 = vpack.c.b16 %v669, %v668
  %v690 = vpack.c.b16 %v671, %v670
  %v691 = vpack.c.b16 %v673, %v672
  %v692 = vpack.c.b16 %v675, %v674
  %v693 = vpack.c.b16 %v677, %v676
  %v700 = vunpack.c.l.b16 %v608
  %v701 = vunpack.c.l.b16 %v609
  %v702 = vunpack.c.l.b16 %v610
  %v703 = vunpack.c.l.b16 %v611
  %v704 = vunpack.c.l.b16 %v612
  %v705 = vunpack.c.l.b16 %v613
  %v706 = vpack.c.b16 %v701, %v700
  %v707 = vpack.c.b16 %v703, %v702
  %v708 = vpack.c.b16 %v705, %v704
  %v713 = vsel %vm198, %v678, 0
  %v716 = vsel %vm198, %v679, 0
  %v719 = vsel %vm198, %v680, 0
  %v722 = vsel %vm198, %v681, 0
  %v725 = vsel %vm198, %v682, 0
  %v728 = vsel %vm198, %v683, 0
  %v731 = vsel %vm198, %v684, 0
  %v734 = vsel %vm198, %v685, 0
  %v737 = vsel %vm198, %v686, 0
  %v740 = vsel %vm198, %v687, 0
  %v743 = vsel %vm198, %v688, 0
  %v746 = vsel %vm198, %v689, 0
  %v749 = vsel %vm198, %v690, 0
  %v752 = vsel %vm198, %v691, 0
  %v755 = vsel %vm198, %v692, 0
  %v758 = vsel %vm198, %v693, 0
  %760 = vmatpush.bf16.msra.mxu0 0
  %761 = vmatpush.bf16.msra.mxu0 0
  %762 = vmatpush.bf16.msra.mxu0 0
  %763 = vmatpush.bf16.msra.mxu0 0
  %764 = vmatpush.bf16.msra.mxu0 0
  %765 = vmatpush.bf16.msra.mxu0 %v708
  %766 = vmatpush.bf16.msra.mxu0 %v707
  %767 = vmatpush.bf16.msra.mxu0 %v706
  %768 = vmatmul.bf16.gmra.mxu0 %v713
  %v769 = vpop.f32.mrf.mxu0
  %v770 = vadd.f32 0.0, %v769
  %v771 = vpop.f32.mrf.mxu0
  %v772 = vadd.f32 0.0, %v771
  %773 = vmatmul.bf16.gmra.mxu0 %v716
  %v774 = vpop.f32.mrf.mxu0
  %v775 = vadd.f32 0.0, %v774
  %v776 = vpop.f32.mrf.mxu0
  %v777 = vadd.f32 0.0, %v776
  %778 = vmatmul.bf16.gmra.mxu0 %v719
  %v779 = vpop.f32.mrf.mxu0
  %v780 = vadd.f32 0.0, %v779
  %v781 = vpop.f32.mrf.mxu0
  %v782 = vadd.f32 0.0, %v781
  %783 = vmatmul.bf16.gmra.mxu0 %v722
  %v784 = vpop.f32.mrf.mxu0
  %v785 = vadd.f32 0.0, %v784
  %v786 = vpop.f32.mrf.mxu0
  %v787 = vadd.f32 0.0, %v786
  %788 = vmatmul.bf16.gmra.mxu0 %v725
  %v789 = vpop.f32.mrf.mxu0
  %v790 = vadd.f32 0.0, %v789
  %v791 = vpop.f32.mrf.mxu0
  %v792 = vadd.f32 0.0, %v791
  %793 = vmatmul.bf16.gmra.mxu0 %v728
  %v794 = vpop.f32.mrf.mxu0
  %v795 = vadd.f32 0.0, %v794
  %v796 = vpop.f32.mrf.mxu0
  %v797 = vadd.f32 0.0, %v796
  %798 = vmatmul.bf16.gmra.mxu0 %v731
  %v799 = vpop.f32.mrf.mxu0
  %v800 = vadd.f32 0.0, %v799
  %v801 = vpop.f32.mrf.mxu0
  %v802 = vadd.f32 0.0, %v801
  %803 = vmatmul.bf16.gmra.mxu0 %v734
  %v804 = vpop.f32.mrf.mxu0
  %v805 = vadd.f32 0.0, %v804
  %v806 = vpop.f32.mrf.mxu0
  %v807 = vadd.f32 0.0, %v806
  %808 = vmatmul.bf16.gmra.mxu0 %v737
  %v809 = vpop.f32.mrf.mxu0
  %v810 = vadd.f32 0.0, %v809
  %v811 = vpop.f32.mrf.mxu0
  %v812 = vadd.f32 0.0, %v811
  %813 = vmatmul.bf16.gmra.mxu0 %v740
  %v814 = vpop.f32.mrf.mxu0
  %v815 = vadd.f32 0.0, %v814
  %v816 = vpop.f32.mrf.mxu0
  %v817 = vadd.f32 0.0, %v816
  %818 = vmatmul.bf16.gmra.mxu0 %v743
  %v819 = vpop.f32.mrf.mxu0
  %v820 = vadd.f32 0.0, %v819
  %v821 = vpop.f32.mrf.mxu0
  %v822 = vadd.f32 0.0, %v821
  %823 = vmatmul.bf16.gmra.mxu0 %v746
  %v824 = vpop.f32.mrf.mxu0
  %v825 = vadd.f32 0.0, %v824
  %v826 = vpop.f32.mrf.mxu0
  %v827 = vadd.f32 0.0, %v826
  %828 = vmatmul.bf16.gmra.mxu0 %v749
  %v829 = vpop.f32.mrf.mxu0
  %v830 = vadd.f32 0.0, %v829
  %v831 = vpop.f32.mrf.mxu0
  %v832 = vadd.f32 0.0, %v831
  %833 = vmatmul.bf16.gmra.mxu0 %v752
  %v834 = vpop.f32.mrf.mxu0
  %v835 = vadd.f32 0.0, %v834
  %v836 = vpop.f32.mrf.mxu0
  %v837 = vadd.f32 0.0, %v836
  %838 = vmatmul.bf16.gmra.mxu0 %v755
  %v839 = vpop.f32.mrf.mxu0
  %v840 = vadd.f32 0.0, %v839
  %v841 = vpop.f32.mrf.mxu0
  %v842 = vadd.f32 0.0, %v841
  %843 = vmatmul.bf16.gmra.mxu0 %v758
  %v844 = vpop.f32.mrf.mxu0
  %v845 = vadd.f32 0.0, %v844
  %v846 = vpop.f32.mrf.mxu0
  %v847 = vadd.f32 0.0, %v846
  %848 = vdwg.mxu0
  %v849 = vadd.f32 %v492, %v770
  %v850 = vadd.f32 %v494, %v772
  %v851 = vadd.f32 %v497, %v775
  %v852 = vadd.f32 %v499, %v777
  %v853 = vadd.f32 %v502, %v780
  %v854 = vadd.f32 %v504, %v782
  %v855 = vadd.f32 %v507, %v785
  %v856 = vadd.f32 %v509, %v787
  %v857 = vadd.f32 %v512, %v790
  %v858 = vadd.f32 %v514, %v792
  %v859 = vadd.f32 %v517, %v795
  %v860 = vadd.f32 %v519, %v797
  %v861 = vadd.f32 %v522, %v800
  %v862 = vadd.f32 %v524, %v802
  %v863 = vadd.f32 %v527, %v805
  %v864 = vadd.f32 %v529, %v807
  %v865 = vadd.f32 %v532, %v810
  %v866 = vadd.f32 %v534, %v812
  %v867 = vadd.f32 %v537, %v815
  %v868 = vadd.f32 %v539, %v817
  %v869 = vadd.f32 %v542, %v820
  %v870 = vadd.f32 %v544, %v822
  %v871 = vadd.f32 %v547, %v825
  %v872 = vadd.f32 %v549, %v827
  %v873 = vadd.f32 %v552, %v830
  %v874 = vadd.f32 %v554, %v832
  %v875 = vadd.f32 %v557, %v835
  %v876 = vadd.f32 %v559, %v837
  %v877 = vadd.f32 %v562, %v840
  %v878 = vadd.f32 %v564, %v842
  %v879 = vadd.f32 %v567, %v845
  %v880 = vadd.f32 %v569, %v847
  %v881 = vld [vmem:[%s2] sm:$0x1]
  %v883 = vperm.slane %v881, 0
  %v885 = vadd.f32 %v849, %v883
  %v886 = vadd.f32 %v850, %v883
  %v887 = vadd.f32 %v851, %v883
  %v888 = vadd.f32 %v852, %v883
  %v889 = vadd.f32 %v853, %v883
  %v890 = vadd.f32 %v854, %v883
  %v891 = vadd.f32 %v855, %v883
  %v892 = vadd.f32 %v856, %v883
  %v893 = vadd.f32 %v857, %v883
  %v894 = vadd.f32 %v858, %v883
  %v895 = vadd.f32 %v859, %v883
  %v896 = vadd.f32 %v860, %v883
  %v897 = vadd.f32 %v861, %v883
  %v898 = vadd.f32 %v862, %v883
  %v899 = vadd.f32 %v863, %v883
  %v900 = vadd.f32 %v864, %v883
  %v901 = vadd.f32 %v865, %v883
  %v902 = vadd.f32 %v866, %v883
  %v903 = vadd.f32 %v867, %v883
  %v904 = vadd.f32 %v868, %v883
  %v905 = vadd.f32 %v869, %v883
  %v906 = vadd.f32 %v870, %v883
  %v907 = vadd.f32 %v871, %v883
  %v908 = vadd.f32 %v872, %v883
  %v909 = vadd.f32 %v873, %v883
  %v910 = vadd.f32 %v874, %v883
  %v911 = vadd.f32 %v875, %v883
  %v912 = vadd.f32 %v876, %v883
  %v913 = vadd.f32 %v877, %v883
  %v914 = vadd.f32 %v878, %v883
  %v915 = vadd.f32 %v879, %v883
  %v916 = vadd.f32 %v880, %v883
  %v917 = vpack.c.bf16 %v885, %v885
  %v918 = vpack.c.bf16 %v886, %v886
  %v919 = vpack.c.bf16 %v887, %v887
  %v920 = vpack.c.bf16 %v888, %v888
  %v921 = vpack.c.bf16 %v889, %v889
  %v922 = vpack.c.bf16 %v890, %v890
  %v923 = vpack.c.bf16 %v891, %v891
  %v924 = vpack.c.bf16 %v892, %v892
  %v925 = vpack.c.bf16 %v893, %v893
  %v926 = vpack.c.bf16 %v894, %v894
  %v927 = vpack.c.bf16 %v895, %v895
  %v928 = vpack.c.bf16 %v896, %v896
  %v929 = vpack.c.bf16 %v897, %v897
  %v930 = vpack.c.bf16 %v898, %v898
  %v931 = vpack.c.bf16 %v899, %v899
  %v932 = vpack.c.bf16 %v900, %v900
  %v933 = vpack.c.bf16 %v901, %v901
  %v934 = vpack.c.bf16 %v902, %v902
  %v935 = vpack.c.bf16 %v903, %v903
  %v936 = vpack.c.bf16 %v904, %v904
  %v937 = vpack.c.bf16 %v905, %v905
  %v938 = vpack.c.bf16 %v906, %v906
  %v939 = vpack.c.bf16 %v907, %v907
  %v940 = vpack.c.bf16 %v908, %v908
  %v941 = vpack.c.bf16 %v909, %v909
  %v942 = vpack.c.bf16 %v910, %v910
  %v943 = vpack.c.bf16 %v911, %v911
  %v944 = vpack.c.bf16 %v912, %v912
  %v945 = vpack.c.bf16 %v913, %v913
  %v946 = vpack.c.bf16 %v914, %v914
  %v947 = vpack.c.bf16 %v915, %v915
  %v948 = vpack.c.bf16 %v916, %v916
  %949 = vst [vmem:[%s3] sm:$0xf] %v917
  %950 = vst [vmem:[%s3 + $0x4] sm:$0xf] %v918
  %951 = vst [vmem:[%s3 + $0x8] sm:$0xf] %v919
  %952 = vst [vmem:[%s3 + $0xc] sm:$0xf] %v920
  %953 = vst [vmem:[%s3 + $0x10] sm:$0xf] %v921
  %954 = vst [vmem:[%s3 + $0x14] sm:$0xf] %v922
  %955 = vst [vmem:[%s3 + $0x18] sm:$0xf] %v923
  %956 = vst [vmem:[%s3 + $0x1c] sm:$0xf] %v924
  %957 = vst [vmem:[%s3 + $0x20] sm:$0xf] %v925
  %958 = vst [vmem:[%s3 + $0x24] sm:$0xf] %v926
  %959 = vst [vmem:[%s3 + $0x28] sm:$0xf] %v927
  %960 = vst [vmem:[%s3 + $0x2c] sm:$0xf] %v928
  %961 = vst [vmem:[%s3 + $0x30] sm:$0xf] %v929
  %962 = vst [vmem:[%s3 + $0x34] sm:$0xf] %v930
  %963 = vst [vmem:[%s3 + $0x38] sm:$0xf] %v931
  %964 = vst [vmem:[%s3 + $0x3c] sm:$0xf] %v932
  %965 = vst [vmem:[%s3 + $0x40] sm:$0xf] %v933
  %966 = vst [vmem:[%s3 + $0x44] sm:$0xf] %v934
  %967 = vst [vmem:[%s3 + $0x48] sm:$0xf] %v935
  %968 = vst [vmem:[%s3 + $0x4c] sm:$0xf] %v936
  %969 = vst [vmem:[%s3 + $0x50] sm:$0xf] %v937
  %970 = vst [vmem:[%s3 + $0x54] sm:$0xf] %v938
  %971 = vst [vmem:[%s3 + $0x58] sm:$0xf] %v939
  %972 = vst [vmem:[%s3 + $0x5c] sm:$0xf] %v940
  %973 = vst [vmem:[%s3 + $0x60] sm:$0xf] %v941
  %974 = vst [vmem:[%s3 + $0x64] sm:$0xf] %v942
  %975 = vst [vmem:[%s3 + $0x68] sm:$0xf] %v943
  %976 = vst [vmem:[%s3 + $0x6c] sm:$0xf] %v944
  %977 = vst [vmem:[%s3 + $0x70] sm:$0xf] %v945
  %978 = vst [vmem:[%s3 + $0x74] sm:$0xf] %v946
  %979 = vst [vmem:[%s3 + $0x78] sm:$0xf] %v947
  %980 = vst [vmem:[%s3 + $0x7c] sm:$0xf] %v948
  // Predicated region
  $region14: #{modulated_conv2d2_forward.1} parent=0 // pred_check
    _
  $region15: #{modulated_conv2d2_forward.1} parent=0 // pred_check_branch
    %982 = sbr.rel (0) target = $region17
  $region16: #{modulated_conv2d2_forward.1} parent=0 // pred_region
    _
  $region17: #{modulated_conv2d2_forward.1} parent=0 // pred_fallthru
    _
  // Predicated region
  $region18: #{modulated_conv2d2_forward.1} parent=0 // pred_check
    _
  $region19: #{modulated_conv2d2_forward.1} parent=0 // pred_check_branch
    %984 = sbr.rel (0) target = $region21
  $region20: #{modulated_conv2d2_forward.1} parent=0 // pred_region
    _
  $region21: #{modulated_conv2d2_forward.1} parent=0 // pred_fallthru
    _

</llo_original>
